<compile_context>
chip_gen: v7x
topology: tpu7x:2x2x1
jax: 0.10.0
libtpu: 0.0.40
codegen_flags: <defaults>
</compile_context>

<pallas_src>
import math

import jax
import jax.numpy as jnp
from jax.experimental import pallas as pl
from jax.experimental.pallas import tpu as pltpu


# Maximum tile sizes.  Worst-case working set (double-buffered x/w/out tiles +
# f32 accumulator) stays a few MiB -> safe on v5e (16 MiB default scoped VMEM),
# v6e (32 MiB) and v7x (64 MiB physical).
_TB_MAX = 256        # rows of x per tile   (sublane axis, multiple of 8)
_TK_MAX = 512        # contraction tile     (lane axis, multiple of 128)
_TN_MAX = 512        # output-column tile   (lane axis, multiple of 128)
_MB_MAX = 8          # modules batched per grid step (small-shape regime)
_MB_VMEM_BUDGET = 8 * 1024 * 1024   # single-buffer budget when batching modules


def _round_up(x, m):
    return (x + m - 1) // m * m


def _modular_linear_kernel(x_ref, w_ref, b_ref, o_ref, acc_ref):
    # x_ref: (mb, tb, tk)  w_ref: (mb, tk, tn)  b_ref: (mb, 1, tn)
    # o_ref: (mb, tb, tn)  acc_ref: (mb, tb, tn) f32 scratch
    k = pl.program_id(3)

    @pl.when(k == 0)
    def _init():
        acc_ref[...] = jnp.zeros_like(acc_ref)

    acc_ref[...] += jnp.einsum(
        "mbk,mkn->mbn", x_ref[...], w_ref[...],
        preferred_element_type=jnp.float32)

    @pl.when(k == pl.num_programs(3) - 1)
    def _finalize():
        # Bias is only touched once, in the finalize step (correct under
        # K-tiling; avoids re-broadcasting it every K iteration).
        o_ref[...] = (acc_ref[...] + b_ref[...].astype(jnp.float32)
                      ).astype(o_ref.dtype)


@jax.jit
def modular_linear(x, weight, bias):
    """x: (M, B, K), weight: (M, K, N), bias: (M, 1, N) -> (M, B, N)."""
    M, B, K = x.shape
    _, _, N = weight.shape
    out_dtype = x.dtype
    itemsize = jnp.dtype(out_dtype).itemsize

    # --- tile sizes: lane dims padded to 128, sublane dim to 8 --------------
    tb = min(_TB_MAX, _round_up(B, 8))
    tk = min(_TK_MAX, _round_up(K, 128))
    tn = min(_TN_MAX, _round_up(N, 128))

    # Batch several modules per grid step when one module is a single tile
    # (amortises ~600-cycle per-step overhead; keeps both v7x TCs busy).
    single_tile = (_round_up(B, 8) <= tb and _round_up(K, 128) <= tk
                   and _round_up(N, 128) <= tn)
    mb = 1
    if single_tile:
        per_mod_bytes = (tb * tk + tk * tn + tn + tb * tn) * itemsize + tb * tn * 4
        mb = int(max(1, min(M, _MB_MAX, _MB_VMEM_BUDGET // per_mod_bytes)))

    B_pad = _round_up(B, tb)
    K_pad = _round_up(K, tk)
    N_pad = _round_up(N, tn)
    M_pad = _round_up(M, mb)

    # --- zero-pad to tile multiples: lane-dense stores, aligned MXU tiles.
    #     Zero padding along K contributes nothing; padded rows/cols/modules
    #     are sliced off after the call, so the result is exact. -------------
    x_p, w_p, b_p = x, weight, bias
    if (M_pad, B_pad, K_pad) != (M, B, K):
        x_p = jnp.pad(x, ((0, M_pad - M), (0, B_pad - B), (0, K_pad - K)))
    if (M_pad, K_pad, N_pad) != (M, K, N):
        w_p = jnp.pad(weight, ((0, M_pad - M), (0, K_pad - K), (0, N_pad - N)))
    if (M_pad, N_pad) != (M, N):
        b_p = jnp.pad(bias, ((0, M_pad - M), (0, 0), (0, N_pad - N)))

    grid = (M_pad // mb, B_pad // tb, N_pad // tn, K_pad // tk)

    cost = pl.CostEstimate(
        flops=2 * M_pad * B_pad * K_pad * N_pad,
        transcendentals=0,
        bytes_accessed=(x_p.size + w_p.size + b_p.size
                        + M_pad * B_pad * N_pad) * itemsize,
    )

    out = pl.pallas_call(
        _modular_linear_kernel,
        out_shape=jax.ShapeDtypeStruct((M_pad, B_pad, N_pad), out_dtype),
        grid_spec=pltpu.PrefetchScalarGridSpec(
            num_scalar_prefetch=0,
            grid=grid,
            in_specs=[
                pl.BlockSpec((mb, tb, tk), lambda m, b, n, k: (m, b, k)),
                pl.BlockSpec((mb, tk, tn), lambda m, b, n, k: (m, k, n)),
                pl.BlockSpec((mb, 1, tn), lambda m, b, n, k: (m, 0, n)),
            ],
            out_specs=pl.BlockSpec((mb, tb, tn), lambda m, b, n, k: (m, b, n)),
            scratch_shapes=[pltpu.VMEM((mb, tb, tn), jnp.float32)],
        ),
        compiler_params=pltpu.CompilerParams(
            dimension_semantics=("parallel", "parallel", "parallel", "arbitrary"),
            vmem_limit_bytes=48 * 1024 * 1024,
        ),
        cost_estimate=cost,
    )(x_p, w_p, b_p)

    return out[:M, :B, :N]


if __name__ == "__main__":
    # Small shapes consistent with the module.
    num_modules = 4
    batch = 8
    in_features = 32
    out_features = 32

    key = jax.random.PRNGKey(0)
    kx, kw, kb = jax.random.split(key, 3)

    # Deterministic parameter init mirroring reset_parameters():
    # uniform(-1/sqrt(in_features), 1/sqrt(in_features)).
    std_dev = 1.0 / math.sqrt(in_features)
    weight = jax.random.uniform(
        kw, (num_modules, in_features, out_features),
        minval=-std_dev, maxval=std_dev, dtype=jnp.float32)
    bias = jax.random.uniform(
        kb, (num_modules, 1, out_features),
        minval=-std_dev, maxval=std_dev, dtype=jnp.float32)

    # Input: one (batch, in_features) slab per module.
    x = jax.random.normal(
        kx, (num_modules, batch, in_features), dtype=jnp.float32)

    out = modular_linear(x, weight, bias)
    out = jax.block_until_ready(out)

    # Reference check against plain JAX (same semantics as torch.matmul + bias).
    ref = jnp.matmul(x, weight) + bias
    assert out.shape == (num_modules, batch, out_features)
    assert jnp.allclose(out, ref, atol=1e-4, rtol=1e-4)

    print("KERNEL_OK")
</pallas_src>

<mosaic_0001>
module attributes {stable_mosaic.version = 11 : i64} {
  func.func @_modular_linear_kernel(%arg0: i32, %arg1: i32, %arg2: i32, %arg3: i32, %arg4: memref<4x8x128xf32, #tpu.memory_space<vmem>>, %arg5: memref<4x128x128xf32, #tpu.memory_space<vmem>>, %arg6: memref<4x1x128xf32, #tpu.memory_space<vmem>>, %arg7: memref<4x8x128xf32, #tpu.memory_space<vmem>>, %arg8: memref<4x8x128xf32, #tpu.memory_space<vmem>>) attributes {dimension_semantics = [#tpu.dimension_semantics<parallel>, #tpu.dimension_semantics<parallel>, #tpu.dimension_semantics<parallel>, #tpu.dimension_semantics<arbitrary>], iteration_bounds = array<i64: 1, 1, 1, 1>, scalar_prefetch = 0 : i64, scratch_operands = 1 : i64, tpu.core_type = #tpu.core_type<tc>, window_params = [{transform_indices = @transform_0, window_bounds = array<i64: 4, 8, 128>}, {transform_indices = @transform_1, window_bounds = array<i64: 4, 128, 128>}, {transform_indices = @transform_2, window_bounds = array<i64: 4, 1, 128>}, {transform_indices = @transform_3, window_bounds = array<i64: 4, 8, 128>}]} {
    %c0_i32 = arith.constant 0 : i32
    %0 = arith.cmpi eq, %arg3, %c0_i32 : i32
    %1 = arith.extui %0 : i1 to i32
    %c0_i32_0 = arith.constant 0 : i32
    %2 = arith.cmpi ne, %1, %c0_i32_0 : i32
    scf.if %2 {
      %cst_14 = arith.constant 0.000000e+00 : f32
      %12 = vector.broadcast %cst_14 : f32 to vector<4x8x128xf32>
      %c0_15 = arith.constant 0 : index
      %c0_16 = arith.constant 0 : index
      %c0_17 = arith.constant 0 : index
      %13 = vector.load %arg8[%c0_15, %c0_16, %c0_17] : memref<4x8x128xf32, #tpu.memory_space<vmem>>, vector<4x8x128xf32>
      tpu.vector_store %arg8[%c0_15, %c0_16, %c0_17], %12 {strides = array<i32>} : memref<4x8x128xf32, #tpu.memory_space<vmem>>, vector<4x8x128xf32>,
    } else {
    }
    %c0 = arith.constant 0 : index
    %c0_1 = arith.constant 0 : index
    %c0_2 = arith.constant 0 : index
    %3 = vector.load %arg8[%c0, %c0_1, %c0_2] : memref<4x8x128xf32, #tpu.memory_space<vmem>>, vector<4x8x128xf32>
    %c0_3 = arith.constant 0 : index
    %c0_4 = arith.constant 0 : index
    %c0_5 = arith.constant 0 : index
    %4 = vector.load %arg4[%c0_3, %c0_4, %c0_5] : memref<4x8x128xf32, #tpu.memory_space<vmem>>, vector<4x8x128xf32>
    %c0_6 = arith.constant 0 : index
    %c0_7 = arith.constant 0 : index
    %c0_8 = arith.constant 0 : index
    %5 = vector.load %arg5[%c0_6, %c0_7, %c0_8] : memref<4x128x128xf32, #tpu.memory_space<vmem>>, vector<4x128x128xf32>
    "tpu.trace_start"() <{level = 10 : i32, message = "mbk,mkn->mbn"}> : () -> ()
    %cst = arith.constant dense<0.000000e+00> : vector<4x8x128xf32>
    %6 = tpu.matmul %4, %5, %cst {dimension_numbers = #tpu.dot_dimension_numbers<[2], [1], [1], [2], [0, 0, 0, 1, 1, 2], [0], [0]>} : vector<4x8x128xf32>, vector<4x128x128xf32>, vector<4x8x128xf32> -> vector<4x8x128xf32>
    "tpu.trace_stop"() : () -> ()
    %7 = arith.addf %3, %6 : vector<4x8x128xf32>
    %c0_9 = arith.constant 0 : index
    %c0_10 = arith.constant 0 : index
    %c0_11 = arith.constant 0 : index
    %8 = vector.load %arg8[%c0_9, %c0_10, %c0_11] : memref<4x8x128xf32, #tpu.memory_space<vmem>>, vector<4x8x128xf32>
    tpu.vector_store %arg8[%c0_9, %c0_10, %c0_11], %7 {strides = array<i32>} : memref<4x8x128xf32, #tpu.memory_space<vmem>>, vector<4x8x128xf32>,
    %c0_i32_12 = arith.constant 0 : i32
    %9 = arith.cmpi eq, %arg3, %c0_i32_12 : i32
    %10 = arith.extui %9 : i1 to i32
    %c0_i32_13 = arith.constant 0 : i32
    %11 = arith.cmpi ne, %10, %c0_i32_13 : i32
    scf.if %11 {
      %c0_14 = arith.constant 0 : index
      %c0_15 = arith.constant 0 : index
      %c0_16 = arith.constant 0 : index
      %12 = vector.load %arg8[%c0_14, %c0_15, %c0_16] : memref<4x8x128xf32, #tpu.memory_space<vmem>>, vector<4x8x128xf32>
      %c0_17 = arith.constant 0 : index
      %c0_18 = arith.constant 0 : index
      %c0_19 = arith.constant 0 : index
      %13 = vector.load %arg6[%c0_17, %c0_18, %c0_19] : memref<4x1x128xf32, #tpu.memory_space<vmem>>, vector<4x1x128xf32>
      %14 = vector.broadcast %13 : vector<4x1x128xf32> to vector<4x8x128xf32>
      %15 = arith.addf %12, %14 : vector<4x8x128xf32>
      %c0_20 = arith.constant 0 : index
      %c0_21 = arith.constant 0 : index
      %c0_22 = arith.constant 0 : index
      %16 = vector.load %arg7[%c0_20, %c0_21, %c0_22] : memref<4x8x128xf32, #tpu.memory_space<vmem>>, vector<4x8x128xf32>
      tpu.vector_store %arg7[%c0_20, %c0_21, %c0_22], %15 {strides = array<i32>} : memref<4x8x128xf32, #tpu.memory_space<vmem>>, vector<4x8x128xf32>,
    } else {
    }
    return
  }
  func.func @transform_0(%arg0: i32, %arg1: i32, %arg2: i32, %arg3: i32) -> (i32, i32, i32) {
    %c0_i32 = arith.constant 0 : i32
    return %arg0, %arg1, %arg3 : i32, i32, i32
  }
  func.func @transform_1(%arg0: i32, %arg1: i32, %arg2: i32, %arg3: i32) -> (i32, i32, i32) {
    %c0_i32 = arith.constant 0 : i32
    return %arg0, %arg3, %arg2 : i32, i32, i32
  }
  func.func @transform_2(%arg0: i32, %arg1: i32, %arg2: i32, %arg3: i32) -> (i32, i32, i32) {
    %c0_i32 = arith.constant 0 : i32
    %c0_i32_0 = arith.constant 0 : i32
    return %arg0, %c0_i32, %arg2 : i32, i32, i32
  }
  func.func @transform_3(%arg0: i32, %arg1: i32, %arg2: i32, %arg3: i32) -> (i32, i32, i32) {
    %c0_i32 = arith.constant 0 : i32
    return %arg0, %arg1, %arg2 : i32, i32, i32
  }
}

</mosaic_0001>

<llo_original>
// kernel: modular_linear.1
$region0: #{modular_linear.1}
  #allocation0 [shape = 'u32[]', space=smem, size = 0x4, offset = 0x4, fixed_abs, tag = 'smem constant byte address 0x4 - core index']
  #allocation1 [shape = 'u32[144,128]{1,0:T(1,128)}', space=vmem, size = 0x12000, scoped, tag = 'internal scratch']
  #allocation2 [shape = 'f32[4,8,128]{2,1,0:T(8,128)}', space=vmem, size = 0x4000, scoped, tag = 'scratch operand']
  %s0 = inlined_call_operand.vmem [shape: f32[4,8,128], index: 0, kind: input, shape index: {}]
  %s1 = inlined_call_operand.vmem [shape: f32[4,128,128], index: 1, kind: input, shape index: {}]
  %s2 = inlined_call_operand.vmem [shape: f32[4,1,128], index: 2, kind: input, shape index: {}]
  %s3 = inlined_call_operand.hbm [shape: f32[4,8,128], index: 3, kind: output, shape index: {}]
  %s4 = sld [smem:[#allocation0]]
  $region30: #{modular_linear.1} parent=0
    _
  %s6 = ssub.s32 1, %s4
  %s7 = scalar_select 0, %s6, %s4
  $region1: #{modular_linear.1} parent=0
    #allocation3 [shape = 'u8[16384]{0}', space=vmem, size = 0x4000, scoped, tag = 'output window, operand 0, single buffered']
    #allocation4 [shape = 's32[1]{0}', space=sflag, size = 0x4, scoped, tag = 'scoped memory for modular_linear.1']
    %8 = vsyncpa [#allocation4], 0
    // Predicated region
    $region2: #{modular_linear.1} parent=1 // pred_check
      _
    $region3: #{modular_linear.1} parent=1 // pred_check_branch
      %10 = sbr.rel (0) target = $region5
    $region4: #{modular_linear.1} parent=1 // pred_region
      _
    $region5: #{modular_linear.1} parent=1 // pred_fallthru
      _
    // Predicated region
    $region6: #{modular_linear.1} parent=1 // pred_check
      _
    $region7: #{modular_linear.1} parent=1 // pred_check_branch
      %12 = sbr.rel (0) target = $region9
    $region8: #{modular_linear.1} parent=1 // pred_region
      _
    $region9: #{modular_linear.1} parent=1 // pred_fallthru
      _
    // Predicated region
    $region10: #{modular_linear.1} parent=1 // pred_check
      _
    $region11: #{modular_linear.1} parent=1 // pred_check_branch
      %14 = sbr.rel (0) target = $region13
    $region12: #{modular_linear.1} parent=1 // pred_region
      _
    $region13: #{modular_linear.1} parent=1 // pred_fallthru
      _
    %p15 = scmp.eq.s32.totalorder 0, 0
    // Predicated region
    $region14: #{modular_linear.1} parent=1 // pred_check
      %p16 = pneg %p15
    $region15: #{modular_linear.1} parent=1 // pred_check_branch
      %18 = sbr.rel (%p16) target = $region17
    $region16: #{modular_linear.1} parent=1 // pred_region
      %19 = vst [vmem:[#allocation2] sm:$0xff] 0.0
      %20 = vst [vmem:[#allocation2 + $0x8] sm:$0xff] 0.0
      %21 = vst [vmem:[#allocation2 + $0x10] sm:$0xff] 0.0
      %22 = vst [vmem:[#allocation2 + $0x18] sm:$0xff] 0.0
    $region17: #{modular_linear.1} parent=1 // pred_fallthru
      _
    %v23 = vld [vmem:[#allocation2] sm:$0xff]
    %v24 = vld [vmem:[#allocation2 + $0x8] sm:$0xff]
    %v25 = vld [vmem:[#allocation2 + $0x10] sm:$0xff]
    %v26 = vld [vmem:[#allocation2 + $0x18] sm:$0xff]
    %v27 = vld [vmem:[%s0] sm:$0xff]
    %v28 = vld [vmem:[%s0 + $0x8] sm:$0xff]
    %v29 = vld [vmem:[%s0 + $0x10] sm:$0xff]
    %v30 = vld [vmem:[%s0 + $0x18] sm:$0xff]
    %v31 = vld [vmem:[%s1] sm:$0xff]
    %v32 = vld [vmem:[%s1 + $0x8] sm:$0xff]
    %v33 = vld [vmem:[%s1 + $0x10] sm:$0xff]
    %v34 = vld [vmem:[%s1 + $0x18] sm:$0xff]
    %v35 = vld [vmem:[%s1 + $0x20] sm:$0xff]
    %v36 = vld [vmem:[%s1 + $0x28] sm:$0xff]
    %v37 = vld [vmem:[%s1 + $0x30] sm:$0xff]
    %v38 = vld [vmem:[%s1 + $0x38] sm:$0xff]
    %v39 = vld [vmem:[%s1 + $0x40] sm:$0xff]
    %v40 = vld [vmem:[%s1 + $0x48] sm:$0xff]
    %v41 = vld [vmem:[%s1 + $0x50] sm:$0xff]
    %v42 = vld [vmem:[%s1 + $0x58] sm:$0xff]
    %v43 = vld [vmem:[%s1 + $0x60] sm:$0xff]
    %v44 = vld [vmem:[%s1 + $0x68] sm:$0xff]
    %v45 = vld [vmem:[%s1 + $0x70] sm:$0xff]
    %v46 = vld [vmem:[%s1 + $0x78] sm:$0xff]
    %v47 = vld [vmem:[%s1 + $0x80] sm:$0xff]
    %v48 = vld [vmem:[%s1 + $0x88] sm:$0xff]
    %v49 = vld [vmem:[%s1 + $0x90] sm:$0xff]
    %v50 = vld [vmem:[%s1 + $0x98] sm:$0xff]
    %v51 = vld [vmem:[%s1 + $0xa0] sm:$0xff]
    %v52 = vld [vmem:[%s1 + $0xa8] sm:$0xff]
    %v53 = vld [vmem:[%s1 + $0xb0] sm:$0xff]
    %v54 = vld [vmem:[%s1 + $0xb8] sm:$0xff]
    %v55 = vld [vmem:[%s1 + $0xc0] sm:$0xff]
    %v56 = vld [vmem:[%s1 + $0xc8] sm:$0xff]
    %v57 = vld [vmem:[%s1 + $0xd0] sm:$0xff]
    %v58 = vld [vmem:[%s1 + $0xd8] sm:$0xff]
    %v59 = vld [vmem:[%s1 + $0xe0] sm:$0xff]
    %v60 = vld [vmem:[%s1 + $0xe8] sm:$0xff]
    %v61 = vld [vmem:[%s1 + $0xf0] sm:$0xff]
    %v62 = vld [vmem:[%s1 + $0xf8] sm:$0xff]
    %v63 = vld [vmem:[%s1 + $0x100] sm:$0xff]
    %v64 = vld [vmem:[%s1 + $0x108] sm:$0xff]
    %v65 = vld [vmem:[%s1 + $0x110] sm:$0xff]
    %v66 = vld [vmem:[%s1 + $0x118] sm:$0xff]
    %v67 = vld [vmem:[%s1 + $0x120] sm:$0xff]
    %v68 = vld [vmem:[%s1 + $0x128] sm:$0xff]
    %v69 = vld [vmem:[%s1 + $0x130] sm:$0xff]
    %v70 = vld [vmem:[%s1 + $0x138] sm:$0xff]
    %v71 = vld [vmem:[%s1 + $0x140] sm:$0xff]
    %v72 = vld [vmem:[%s1 + $0x148] sm:$0xff]
    %v73 = vld [vmem:[%s1 + $0x150] sm:$0xff]
    %v74 = vld [vmem:[%s1 + $0x158] sm:$0xff]
    %v75 = vld [vmem:[%s1 + $0x160] sm:$0xff]
    %v76 = vld [vmem:[%s1 + $0x168] sm:$0xff]
    %v77 = vld [vmem:[%s1 + $0x170] sm:$0xff]
    %v78 = vld [vmem:[%s1 + $0x178] sm:$0xff]
    %v79 = vld [vmem:[%s1 + $0x180] sm:$0xff]
    %v80 = vld [vmem:[%s1 + $0x188] sm:$0xff]
    %v81 = vld [vmem:[%s1 + $0x190] sm:$0xff]
    %v82 = vld [vmem:[%s1 + $0x198] sm:$0xff]
    %v83 = vld [vmem:[%s1 + $0x1a0] sm:$0xff]
    %v84 = vld [vmem:[%s1 + $0x1a8] sm:$0xff]
    %v85 = vld [vmem:[%s1 + $0x1b0] sm:$0xff]
    %v86 = vld [vmem:[%s1 + $0x1b8] sm:$0xff]
    %v87 = vld [vmem:[%s1 + $0x1c0] sm:$0xff]
    %v88 = vld [vmem:[%s1 + $0x1c8] sm:$0xff]
    %v89 = vld [vmem:[%s1 + $0x1d0] sm:$0xff]
    %v90 = vld [vmem:[%s1 + $0x1d8] sm:$0xff]
    %v91 = vld [vmem:[%s1 + $0x1e0] sm:$0xff]
    %v92 = vld [vmem:[%s1 + $0x1e8] sm:$0xff]
    %v93 = vld [vmem:[%s1 + $0x1f0] sm:$0xff]
    %v94 = vld [vmem:[%s1 + $0x1f8] sm:$0xff]
    %95 = vmatprep.subr.mxu0 0.0
    %96 = vmatpush1.msra.mxu0 %v31
    %97 = vmatprep.subr.mxu0 0.0
    %98 = vmatpush1.msra.mxu0 %v32
    %99 = vmatprep.subr.mxu0 0.0
    %100 = vmatpush1.msra.mxu0 %v33
    %101 = vmatprep.subr.mxu0 0.0
    %102 = vmatpush1.msra.mxu0 %v34
    %103 = vmatprep.subr.mxu0 0.0
    %104 = vmatpush1.msra.mxu0 %v35
    %105 = vmatprep.subr.mxu0 0.0
    %106 = vmatpush1.msra.mxu0 %v36
    %107 = vmatprep.subr.mxu0 0.0
    %108 = vmatpush1.msra.mxu0 %v37
    %109 = vmatprep.subr.mxu0 0.0
    %110 = vmatpush1.msra.mxu0 %v38
    %111 = vmatprep.subr.mxu0 0.0
    %112 = vmatpush1.msra.mxu0 %v39
    %113 = vmatprep.subr.mxu0 0.0
    %114 = vmatpush1.msra.mxu0 %v40
    %115 = vmatprep.subr.mxu0 0.0
    %116 = vmatpush1.msra.mxu0 %v41
    %117 = vmatprep.subr.mxu0 0.0
    %118 = vmatpush1.msra.mxu0 %v42
    %119 = vmatprep.subr.mxu0 0.0
    %120 = vmatpush1.msra.mxu0 %v43
    %121 = vmatprep.subr.mxu0 0.0
    %122 = vmatpush1.msra.mxu0 %v44
    %123 = vmatprep.subr.mxu0 0.0
    %124 = vmatpush1.msra.mxu0 %v45
    %125 = vmatprep.subr.mxu0 0.0
    %126 = vmatpush1.msra.mxu0 %v46
    %127 = vmatprep.subr.mxu0 0.0
    %128 = vmatpush1.msra.mxu0 0.0
    %129 = vmatprep.subr.mxu0 0.0
    %130 = vmatpush1.msra.mxu0 0.0
    %131 = vmatprep.subr.mxu0 0.0
    %132 = vmatpush1.msra.mxu0 0.0
    %133 = vmatprep.subr.mxu0 0.0
    %134 = vmatpush1.msra.mxu0 0.0
    %135 = vmatprep.subr.mxu0 0.0
    %136 = vmatpush1.msra.mxu0 0.0
    %137 = vmatprep.subr.mxu0 0.0
    %138 = vmatpush1.msra.mxu0 0.0
    %139 = vmatprep.subr.mxu0 0.0
    %140 = vmatpush1.msra.mxu0 0.0
    %141 = vmatprep.subr.mxu0 0.0
    %142 = vmatpush1.msra.mxu0 0.0
    %143 = vmatprep.subr.mxu0 0.0
    %144 = vmatpush1.msra.mxu0 0.0
    %145 = vmatprep.subr.mxu0 0.0
    %146 = vmatpush1.msra.mxu0 0.0
    %147 = vmatprep.subr.mxu0 0.0
    %148 = vmatpush1.msra.mxu0 0.0
    %149 = vmatprep.subr.mxu0 0.0
    %150 = vmatpush1.msra.mxu0 0.0
    %151 = vmatprep.subr.mxu0 0.0
    %152 = vmatpush1.msra.mxu0 0.0
    %153 = vmatprep.subr.mxu0 0.0
    %154 = vmatpush1.msra.mxu0 0.0
    %155 = vmatprep.subr.mxu0 0.0
    %156 = vmatpush1.msra.mxu0 0.0
    %157 = vmatprep.subr.mxu0 0.0
    %158 = vmatpush1.msra.mxu0 0.0
    %159 = vmatprep.mubr.f32.mxu0 0.0
    %160 = vmatmul.mubr.f32.gmra.mrb[0].mxu0 %v27
    %v161 = vpop.f32.mrb[0].mxu0
    %v162 = vadd.f32 0.0, %v161
    %v163 = vpop.f32.mrb[0].mxu0
    %164 = vdwg.mxu0
    %165 = vmatprep.subr.mxu0 0.0
    %166 = vmatpush1.msra.mxu0 %v47
    %167 = vmatprep.subr.mxu0 0.0
    %168 = vmatpush1.msra.mxu0 %v48
    %169 = vmatprep.subr.mxu0 0.0
    %170 = vmatpush1.msra.mxu0 %v49
    %171 = vmatprep.subr.mxu0 0.0
    %172 = vmatpush1.msra.mxu0 %v50
    %173 = vmatprep.subr.mxu0 0.0
    %174 = vmatpush1.msra.mxu0 %v51
    %175 = vmatprep.subr.mxu0 0.0
    %176 = vmatpush1.msra.mxu0 %v52
    %177 = vmatprep.subr.mxu0 0.0
    %178 = vmatpush1.msra.mxu0 %v53
    %179 = vmatprep.subr.mxu0 0.0
    %180 = vmatpush1.msra.mxu0 %v54
    %181 = vmatprep.subr.mxu0 0.0
    %182 = vmatpush1.msra.mxu0 %v55
    %183 = vmatprep.subr.mxu0 0.0
    %184 = vmatpush1.msra.mxu0 %v56
    %185 = vmatprep.subr.mxu0 0.0
    %186 = vmatpush1.msra.mxu0 %v57
    %187 = vmatprep.subr.mxu0 0.0
    %188 = vmatpush1.msra.mxu0 %v58
    %189 = vmatprep.subr.mxu0 0.0
    %190 = vmatpush1.msra.mxu0 %v59
    %191 = vmatprep.subr.mxu0 0.0
    %192 = vmatpush1.msra.mxu0 %v60
    %193 = vmatprep.subr.mxu0 0.0
    %194 = vmatpush1.msra.mxu0 %v61
    %195 = vmatprep.subr.mxu0 0.0
    %196 = vmatpush1.msra.mxu0 %v62
    %197 = vmatprep.subr.mxu0 0.0
    %198 = vmatpush1.msra.mxu0 0.0
    %199 = vmatprep.subr.mxu0 0.0
    %200 = vmatpush1.msra.mxu0 0.0
    %201 = vmatprep.subr.mxu0 0.0
    %202 = vmatpush1.msra.mxu0 0.0
    %203 = vmatprep.subr.mxu0 0.0
    %204 = vmatpush1.msra.mxu0 0.0
    %205 = vmatprep.subr.mxu0 0.0
    %206 = vmatpush1.msra.mxu0 0.0
    %207 = vmatprep.subr.mxu0 0.0
    %208 = vmatpush1.msra.mxu0 0.0
    %209 = vmatprep.subr.mxu0 0.0
    %210 = vmatpush1.msra.mxu0 0.0
    %211 = vmatprep.subr.mxu0 0.0
    %212 = vmatpush1.msra.mxu0 0.0
    %213 = vmatprep.subr.mxu0 0.0
    %214 = vmatpush1.msra.mxu0 0.0
    %215 = vmatprep.subr.mxu0 0.0
    %216 = vmatpush1.msra.mxu0 0.0
    %217 = vmatprep.subr.mxu0 0.0
    %218 = vmatpush1.msra.mxu0 0.0
    %219 = vmatprep.subr.mxu0 0.0
    %220 = vmatpush1.msra.mxu0 0.0
    %221 = vmatprep.subr.mxu0 0.0
    %222 = vmatpush1.msra.mxu0 0.0
    %223 = vmatprep.subr.mxu0 0.0
    %224 = vmatpush1.msra.mxu0 0.0
    %225 = vmatprep.subr.mxu0 0.0
    %226 = vmatpush1.msra.mxu0 0.0
    %227 = vmatprep.subr.mxu0 0.0
    %228 = vmatpush1.msra.mxu0 0.0
    %229 = vmatprep.mubr.f32.mxu0 0.0
    %230 = vmatmul.mubr.f32.gmra.mrb[0].mxu0 %v28
    %v231 = vpop.f32.mrb[0].mxu0
    %v232 = vadd.f32 0.0, %v231
    %v233 = vpop.f32.mrb[0].mxu0
    %234 = vdwg.mxu0
    %235 = vmatprep.subr.mxu0 0.0
    %236 = vmatpush1.msra.mxu0 %v63
    %237 = vmatprep.subr.mxu0 0.0
    %238 = vmatpush1.msra.mxu0 %v64
    %239 = vmatprep.subr.mxu0 0.0
    %240 = vmatpush1.msra.mxu0 %v65
    %241 = vmatprep.subr.mxu0 0.0
    %242 = vmatpush1.msra.mxu0 %v66
    %243 = vmatprep.subr.mxu0 0.0
    %244 = vmatpush1.msra.mxu0 %v67
    %245 = vmatprep.subr.mxu0 0.0
    %246 = vmatpush1.msra.mxu0 %v68
    %247 = vmatprep.subr.mxu0 0.0
    %248 = vmatpush1.msra.mxu0 %v69
    %249 = vmatprep.subr.mxu0 0.0
    %250 = vmatpush1.msra.mxu0 %v70
    %251 = vmatprep.subr.mxu0 0.0
    %252 = vmatpush1.msra.mxu0 %v71
    %253 = vmatprep.subr.mxu0 0.0
    %254 = vmatpush1.msra.mxu0 %v72
    %255 = vmatprep.subr.mxu0 0.0
    %256 = vmatpush1.msra.mxu0 %v73
    %257 = vmatprep.subr.mxu0 0.0
    %258 = vmatpush1.msra.mxu0 %v74
    %259 = vmatprep.subr.mxu0 0.0
    %260 = vmatpush1.msra.mxu0 %v75
    %261 = vmatprep.subr.mxu0 0.0
    %262 = vmatpush1.msra.mxu0 %v76
    %263 = vmatprep.subr.mxu0 0.0
    %264 = vmatpush1.msra.mxu0 %v77
    %265 = vmatprep.subr.mxu0 0.0
    %266 = vmatpush1.msra.mxu0 %v78
    %267 = vmatprep.subr.mxu0 0.0
    %268 = vmatpush1.msra.mxu0 0.0
    %269 = vmatprep.subr.mxu0 0.0
    %270 = vmatpush1.msra.mxu0 0.0
    %271 = vmatprep.subr.mxu0 0.0
    %272 = vmatpush1.msra.mxu0 0.0
    %273 = vmatprep.subr.mxu0 0.0
    %274 = vmatpush1.msra.mxu0 0.0
    %275 = vmatprep.subr.mxu0 0.0
    %276 = vmatpush1.msra.mxu0 0.0
    %277 = vmatprep.subr.mxu0 0.0
    %278 = vmatpush1.msra.mxu0 0.0
    %279 = vmatprep.subr.mxu0 0.0
    %280 = vmatpush1.msra.mxu0 0.0
    %281 = vmatprep.subr.mxu0 0.0
    %282 = vmatpush1.msra.mxu0 0.0
    %283 = vmatprep.subr.mxu0 0.0
    %284 = vmatpush1.msra.mxu0 0.0
    %285 = vmatprep.subr.mxu0 0.0
    %286 = vmatpush1.msra.mxu0 0.0
    %287 = vmatprep.subr.mxu0 0.0
    %288 = vmatpush1.msra.mxu0 0.0
    %289 = vmatprep.subr.mxu0 0.0
    %290 = vmatpush1.msra.mxu0 0.0
    %291 = vmatprep.subr.mxu0 0.0
    %292 = vmatpush1.msra.mxu0 0.0
    %293 = vmatprep.subr.mxu0 0.0
    %294 = vmatpush1.msra.mxu0 0.0
    %295 = vmatprep.subr.mxu0 0.0
    %296 = vmatpush1.msra.mxu0 0.0
    %297 = vmatprep.subr.mxu0 0.0
    %298 = vmatpush1.msra.mxu0 0.0
    %299 = vmatprep.mubr.f32.mxu0 0.0
    %300 = vmatmul.mubr.f32.gmra.mrb[0].mxu0 %v29
    %v301 = vpop.f32.mrb[0].mxu0
    %v302 = vadd.f32 0.0, %v301
    %v303 = vpop.f32.mrb[0].mxu0
    %304 = vdwg.mxu0
    %305 = vmatprep.subr.mxu0 0.0
    %306 = vmatpush1.msra.mxu0 %v79
    %307 = vmatprep.subr.mxu0 0.0
    %308 = vmatpush1.msra.mxu0 %v80
    %309 = vmatprep.subr.mxu0 0.0
    %310 = vmatpush1.msra.mxu0 %v81
    %311 = vmatprep.subr.mxu0 0.0
    %312 = vmatpush1.msra.mxu0 %v82
    %313 = vmatprep.subr.mxu0 0.0
    %314 = vmatpush1.msra.mxu0 %v83
    %315 = vmatprep.subr.mxu0 0.0
    %316 = vmatpush1.msra.mxu0 %v84
    %317 = vmatprep.subr.mxu0 0.0
    %318 = vmatpush1.msra.mxu0 %v85
    %319 = vmatprep.subr.mxu0 0.0
    %320 = vmatpush1.msra.mxu0 %v86
    %321 = vmatprep.subr.mxu0 0.0
    %322 = vmatpush1.msra.mxu0 %v87
    %323 = vmatprep.subr.mxu0 0.0
    %324 = vmatpush1.msra.mxu0 %v88
    %325 = vmatprep.subr.mxu0 0.0
    %326 = vmatpush1.msra.mxu0 %v89
    %327 = vmatprep.subr.mxu0 0.0
    %328 = vmatpush1.msra.mxu0 %v90
    %329 = vmatprep.subr.mxu0 0.0
    %330 = vmatpush1.msra.mxu0 %v91
    %331 = vmatprep.subr.mxu0 0.0
    %332 = vmatpush1.msra.mxu0 %v92
    %333 = vmatprep.subr.mxu0 0.0
    %334 = vmatpush1.msra.mxu0 %v93
    %335 = vmatprep.subr.mxu0 0.0
    %336 = vmatpush1.msra.mxu0 %v94
    %337 = vmatprep.subr.mxu0 0.0
    %338 = vmatpush1.msra.mxu0 0.0
    %339 = vmatprep.subr.mxu0 0.0
    %340 = vmatpush1.msra.mxu0 0.0
    %341 = vmatprep.subr.mxu0 0.0
    %342 = vmatpush1.msra.mxu0 0.0
    %343 = vmatprep.subr.mxu0 0.0
    %344 = vmatpush1.msra.mxu0 0.0
    %345 = vmatprep.subr.mxu0 0.0
    %346 = vmatpush1.msra.mxu0 0.0
    %347 = vmatprep.subr.mxu0 0.0
    %348 = vmatpush1.msra.mxu0 0.0
    %349 = vmatprep.subr.mxu0 0.0
    %350 = vmatpush1.msra.mxu0 0.0
    %351 = vmatprep.subr.mxu0 0.0
    %352 = vmatpush1.msra.mxu0 0.0
    %353 = vmatprep.subr.mxu0 0.0
    %354 = vmatpush1.msra.mxu0 0.0
    %355 = vmatprep.subr.mxu0 0.0
    %356 = vmatpush1.msra.mxu0 0.0
    %357 = vmatprep.subr.mxu0 0.0
    %358 = vmatpush1.msra.mxu0 0.0
    %359 = vmatprep.subr.mxu0 0.0
    %360 = vmatpush1.msra.mxu0 0.0
    %361 = vmatprep.subr.mxu0 0.0
    %362 = vmatpush1.msra.mxu0 0.0
    %363 = vmatprep.subr.mxu0 0.0
    %364 = vmatpush1.msra.mxu0 0.0
    %365 = vmatprep.subr.mxu0 0.0
    %366 = vmatpush1.msra.mxu0 0.0
    %367 = vmatprep.subr.mxu0 0.0
    %368 = vmatpush1.msra.mxu0 0.0
    %369 = vmatprep.mubr.f32.mxu0 0.0
    %370 = vmatmul.mubr.f32.gmra.mrb[0].mxu0 %v30
    %v371 = vpop.f32.mrb[0].mxu0
    %v372 = vadd.f32 0.0, %v371
    %v373 = vpop.f32.mrb[0].mxu0
    %374 = vdwg.mxu0
    %v375 = vadd.f32 %v23, %v162
    %v376 = vadd.f32 %v24, %v232
    %v377 = vadd.f32 %v25, %v302
    %v378 = vadd.f32 %v26, %v372
    %379 = vst [vmem:[#allocation2] sm:$0xff] %v375
    %380 = vst [vmem:[#allocation2 + $0x8] sm:$0xff] %v376
    %381 = vst [vmem:[#allocation2 + $0x10] sm:$0xff] %v377
    %382 = vst [vmem:[#allocation2 + $0x18] sm:$0xff] %v378
    // Predicated region
    $region18: #{modular_linear.1} parent=1 // pred_check
      %p383 = pneg %p15
    $region19: #{modular_linear.1} parent=1 // pred_check_branch
      %385 = sbr.rel (%p383) target = $region21
    $region20: #{modular_linear.1} parent=1 // pred_region
      %v386 = vld [vmem:[#allocation2] sm:$0xff]
      %v387 = vld [vmem:[#allocation2 + $0x8] sm:$0xff]
      %v388 = vld [vmem:[#allocation2 + $0x10] sm:$0xff]
      %v389 = vld [vmem:[#allocation2 + $0x18] sm:$0xff]
      %v390 = vld [vmem:[%s2] sm:$0x1]
      %v391 = vld [vmem:[%s2 + $0x1] sm:$0x1]
      %v392 = vld [vmem:[%s2 + $0x2] sm:$0x1]
      %v393 = vld [vmem:[%s2 + $0x3] sm:$0x1]
      %v398 = vlaneseq
      %v399 = vshrl.u32 %v398, 7
      %v400 = vsub.s32 0, %v399
      %v401 = vrot.slane %v390, %v400
      %v402 = vlaneseq
      %v403 = vshrl.u32 %v402, 7
      %v404 = vsub.s32 0, %v403
      %v405 = vrot.slane %v391, %v404
      %v406 = vlaneseq
      %v407 = vshrl.u32 %v406, 7
      %v408 = vsub.s32 0, %v407
      %v409 = vrot.slane %v392, %v408
      %v410 = vlaneseq
      %v411 = vshrl.u32 %v410, 7
      %v412 = vsub.s32 0, %v411
      %v413 = vrot.slane %v393, %v412
      %v418 = vadd.f32 %v386, %v401
      %v419 = vadd.f32 %v387, %v405
      %v420 = vadd.f32 %v388, %v409
      %v421 = vadd.f32 %v389, %v413
      %422 = vst [vmem:[#allocation3] sm:$0xff] %v418
      %423 = vst [vmem:[#allocation3 + $0x8] sm:$0xff] %v419
      %424 = vst [vmem:[#allocation3 + $0x10] sm:$0xff] %v420
      %425 = vst [vmem:[#allocation3 + $0x18] sm:$0xff] %v421
    $region21: #{modular_linear.1} parent=1 // pred_fallthru
      _
    // Predicated region
    $region22: #{modular_linear.1} parent=1 // pred_check
      _
    $region23: #{modular_linear.1} parent=1 // pred_check_branch
      %427 = sbr.rel (0) target = $region25
    $region24: #{modular_linear.1} parent=1 // pred_region
      %s429 = ssub.s32 512, 512
      %430 = vsyncadd [#allocation4], %s429
      %s431 = sshll.u32 [#allocation3], 4
      %s432 = int_to_ptr.vmem [resolvable:$true] %s431
      %437 = dma.vmem_to_hbm [thread:$0]  %s432, 512, %s3, [#allocation4], 128, 128, 8
    $region25: #{modular_linear.1} parent=1 // pred_fallthru
      _
    // Predicated region
    $region26: #{modular_linear.1} parent=1 // pred_check
      _
    $region27: #{modular_linear.1} parent=1 // pred_check_branch
      %439 = sbr.rel (0) target = $region29
    $region28: #{modular_linear.1} parent=1 // pred_region
      %440 = dma.done [#allocation4], 512
    $region29: #{modular_linear.1} parent=1 // pred_fallthru
      _
    %441 = vsyncpa [#allocation4], 1

</llo_original>
